<compile_context>
chip_gen: v6e
topology: v6e:2x2x1
jax: 0.10.0
libtpu: 0.0.40
codegen_flags: <defaults>
</compile_context>

<pallas_src>
import functools

import jax
import jax.numpy as jnp
from jax.experimental import pallas as pl
from jax.experimental.pallas import tpu as pltpu


def _layernorm_kernel(x_ref, wb_ref, o_ref, *, eps):
    # x_ref: (ROW_TILE, H) tile of rows (last block may be partial / masked).
    # wb_ref: (2, H) f32, row 0 = weight, row 1 = bias.
    u = jnp.mean(x_ref[...].astype(jnp.float32), axis=-1, keepdims=True)
    # Re-read x from VMEM for the second pass (vld is cheap: 3 slots/cycle) so
    # the f32 copy of the whole tile is not kept live across the first
    # reduction — shorter live range, bigger tiles fit without spilling.
    xc = x_ref[...].astype(jnp.float32) - u
    s = jnp.mean(xc * xc, axis=-1, keepdims=True)       # biased variance
    inv = jax.lax.rsqrt(s + eps)                        # eps inside sqrt (TF style), EUP rsqrt
    w = wb_ref[0:1, :]
    b = wb_ref[1:2, :]
    o_ref[...] = (w * (xc * inv) + b).astype(o_ref.dtype)


def _cdiv(a, b):
    return (a + b - 1) // b


def _round_up(n, m):
    return _cdiv(n, m) * m


def _vmem_budget_bytes():
    try:
        cap = int(pltpu.get_tpu_info().vmem_capacity_bytes)
    except Exception:
        cap = 64 * 1024 * 1024
    # Conservative: cap at 64 MiB (v7x per-TensorCore VMEM) in case the query
    # reports per-chip capacity, then keep ~70% for our tiles (headroom for
    # compiler scratch / internal buffers).
    cap = min(cap, 64 * 1024 * 1024)
    return int(cap * 0.7)


def _choose_row_tile(n_rows, hidden, itemsize, vmem_budget):
    # Sublane-group alignment per dtype width: f32 -> 8, bf16 -> 16, int8/fp8 -> 32.
    if itemsize == 1:
        align = 32
    elif itemsize == 2:
        align = 16
    else:
        align = 8

    # Byte-based tile target: ~4 MiB per input DMA keeps HBM saturated on all
    # of v5e / v6e / v7x regardless of H.
    target_tile_bytes = 4 * 1024 * 1024
    rows_by_bytes = max(align, target_tile_bytes // max(1, hidden * itemsize))

    # VMEM cap per row of tile: double-buffered in + out (native dtype) plus
    # ~2 full-tile f32 temporaries inside the kernel.
    per_row_bytes = 2 * 2 * hidden * itemsize + 2 * hidden * 4
    rows_by_vmem = max(align, vmem_budget // max(1, per_row_bytes))

    row_tile = min(rows_by_bytes, rows_by_vmem)

    # Aim for >= 8 grid steps (>= 4 per TensorCore on v7x) when the problem is
    # big enough, but never shrink tiles below ~256 rows.
    min_rows = 256
    if n_rows >= 8 * min_rows:
        row_tile = min(row_tile, max(min_rows, n_rows // 8))

    # Align down, and never exceed the (aligned) problem size.
    row_tile = max(align, (row_tile // align) * align)
    row_tile = min(row_tile, _round_up(n_rows, align))

    # Prefer an even step count (balances v7x's two TensorCores). Only adopt
    # the adjustment if it actually lands on an even count.
    steps = _cdiv(n_rows, row_tile)
    if steps > 1 and steps % 2 == 1:
        candidate = _round_up(_cdiv(n_rows, steps + 1), align)
        candidate = max(align, candidate)
        if _cdiv(n_rows, candidate) % 2 == 0:
            row_tile = candidate

    return row_tile


def layer_norm(x, weight, bias, eps=1e-12, row_tile=None):
    """x: (..., H); weight, bias: (H,). Returns same shape/dtype as x.

    Matches the TF-style LayerNorm of the reference module (eps added to the
    variance inside the sqrt; default eps=1e-12 as in the PyTorch spec).

    Contract: the last grid block may be partial; its out-of-bounds rows read
    unspecified data, which is safe because rows are normalized independently
    and OOB writes are masked by Pallas.
    """
    orig_shape = x.shape
    H = orig_shape[-1]
    x2 = x.reshape(-1, H)
    R = x2.shape[0]

    itemsize = jnp.dtype(x.dtype).itemsize
    vmem_budget = _vmem_budget_bytes()
    if row_tile is None:
        row_tile = _choose_row_tile(R, H, itemsize, vmem_budget)

    # weight/bias pre-cast to f32 and packed -> one small constant-index DMA.
    wb = jnp.stack([weight.astype(jnp.float32), bias.astype(jnp.float32)], axis=0)

    # No padding / output slicing: partial last block is handled by Pallas.
    grid = (_cdiv(R, row_tile),)

    # VMEM footprint: double-buffered in + out tiles (native dtype) +
    # in-kernel f32 working set (~2 full-tile temporaries) + wb + headroom.
    tile_bytes = row_tile * H * itemsize
    f32_work = 2 * row_tile * H * 4
    footprint = 4 * tile_bytes + f32_work + 2 * H * 4 + (4 << 20)
    vmem_limit = int(min(48 << 20, max(32 << 20, footprint)))

    # TODO(synk): for very large hidden sizes (H alone exceeding VMEM) add an
    # "arbitrary" grid axis over H chunks with f32 scratch accumulators; keep
    # the final writeback as one contiguous (row_tile, H) lane-dense store.

    out = pl.pallas_call(
        functools.partial(_layernorm_kernel, eps=eps),
        out_shape=jax.ShapeDtypeStruct((R, H), x.dtype),
        grid_spec=pltpu.PrefetchScalarGridSpec(
            num_scalar_prefetch=0,
            grid=grid,
            in_specs=[
                pl.BlockSpec((row_tile, H), lambda i: (i, 0)),
                # Constant block: single-buffered to avoid a second VMEM copy.
                pl.BlockSpec((2, H), lambda i: (0, 0),
                             pipeline_mode=pl.Buffered(1)),
            ],
            out_specs=pl.BlockSpec((row_tile, H), lambda i: (i, 0)),
        ),
        compiler_params=pltpu.CompilerParams(
            dimension_semantics=("parallel",),
            vmem_limit_bytes=vmem_limit,
        ),
    )(x2, wb)

    return out.reshape(orig_shape)


def _reference_layer_norm(x, weight, bias, eps=1e-12):
    x32 = x.astype(jnp.float32)
    u = jnp.mean(x32, axis=-1, keepdims=True)
    s = jnp.mean((x32 - u) ** 2, axis=-1, keepdims=True)
    y = (x32 - u) / jnp.sqrt(s + eps)
    return (weight.astype(jnp.float32) * y + bias.astype(jnp.float32)).astype(x.dtype)


if __name__ == "__main__":
    key = jax.random.PRNGKey(0)
    batch, seq, hidden = 2, 8, 32

    x = jax.random.normal(key, (batch, seq, hidden), dtype=jnp.float32)
    # Deterministic parameter init matching nn.Parameter(torch.ones/zeros(hidden)).
    weight = jnp.ones((hidden,), dtype=jnp.float32)
    bias = jnp.zeros((hidden,), dtype=jnp.float32)

    out = layer_norm(x, weight, bias, eps=1e-12)
    out = jax.block_until_ready(out)

    ref = _reference_layer_norm(x, weight, bias, eps=1e-12)
    assert out.shape == x.shape and out.dtype == x.dtype
    assert jnp.allclose(out, ref, atol=1e-5, rtol=1e-5)

    # Also exercise a partial last block (R not a multiple of the tile) to
    # validate the masked-partial-block path.
    x_odd = jax.random.normal(jax.random.PRNGKey(1), (3, 7, hidden), dtype=jnp.float32)
    out_odd = jax.block_until_ready(layer_norm(x_odd, weight, bias, eps=1e-12))
    ref_odd = _reference_layer_norm(x_odd, weight, bias, eps=1e-12)
    assert jnp.allclose(out_odd, ref_odd, atol=1e-5, rtol=1e-5)

    print("KERNEL_OK")
</pallas_src>

<mosaic_0001>
module attributes {stable_mosaic.version = 11 : i64} {
  func.func @_layernorm_kernel(%arg0: i32, %arg1: memref<16x32xf32, #tpu.memory_space<vmem>>, %arg2: memref<2x32xf32, #tpu.memory_space<vmem>>, %arg3: memref<16x32xf32, #tpu.memory_space<vmem>>) attributes {dimension_semantics = [#tpu.dimension_semantics<parallel>], iteration_bounds = array<i64: 1>, scalar_prefetch = 0 : i64, scratch_operands = 0 : i64, tpu.core_type = #tpu.core_type<tc>, window_params = [{transform_indices = @transform_0, window_bounds = array<i64: 16, 32>}, {pipeline_mode = #tpu.pipeline_mode<synchronous>, transform_indices = @transform_1, window_bounds = array<i64: 2, 32>}, {transform_indices = @transform_2, window_bounds = array<i64: 16, 32>}]} {
    %c0 = arith.constant 0 : index
    %c0_0 = arith.constant 0 : index
    %0 = vector.load %arg1[%c0, %c0_0] : memref<16x32xf32, #tpu.memory_space<vmem>>, vector<16x32xf32>
    %cst = arith.constant dense<0.000000e+00> : vector<16xf32>
    %1 = vector.multi_reduction <add>, %0, %cst [1] : vector<16x32xf32> to vector<16xf32>
    %2 = vector.shape_cast %1 : vector<16xf32> to vector<16x1xf32>
    %cst_1 = arith.constant 3.200000e+01 : f32
    %3 = vector.broadcast %cst_1 : f32 to vector<16x1xf32>
    %4 = arith.divf %2, %3 : vector<16x1xf32>
    %c0_2 = arith.constant 0 : index
    %c0_3 = arith.constant 0 : index
    %5 = vector.load %arg1[%c0_2, %c0_3] : memref<16x32xf32, #tpu.memory_space<vmem>>, vector<16x32xf32>
    %6 = vector.broadcast %4 : vector<16x1xf32> to vector<16x32xf32>
    %7 = arith.subf %5, %6 : vector<16x32xf32>
    %8 = arith.mulf %7, %7 : vector<16x32xf32>
    %cst_4 = arith.constant dense<0.000000e+00> : vector<16xf32>
    %9 = vector.multi_reduction <add>, %8, %cst_4 [1] : vector<16x32xf32> to vector<16xf32>
    %10 = vector.shape_cast %9 : vector<16xf32> to vector<16x1xf32>
    %cst_5 = arith.constant 3.200000e+01 : f32
    %11 = vector.broadcast %cst_5 : f32 to vector<16x1xf32>
    %12 = arith.divf %10, %11 : vector<16x1xf32>
    %cst_6 = arith.constant 9.99999996E-13 : f32
    %13 = vector.broadcast %cst_6 : f32 to vector<16x1xf32>
    %14 = arith.addf %12, %13 : vector<16x1xf32>
    %15 = math.rsqrt %14 : vector<16x1xf32>
    %c0_7 = arith.constant 0 : index
    %c0_8 = arith.constant 0 : index
    %16 = vector.load %arg2[%c0_7, %c0_8] : memref<2x32xf32, #tpu.memory_space<vmem>>, vector<1x32xf32>
    %c1 = arith.constant 1 : index
    %c0_9 = arith.constant 0 : index
    %17 = vector.load %arg2[%c1, %c0_9] : memref<2x32xf32, #tpu.memory_space<vmem>>, vector<1x32xf32>
    %18 = vector.broadcast %15 : vector<16x1xf32> to vector<16x32xf32>
    %19 = arith.mulf %7, %18 : vector<16x32xf32>
    %20 = vector.broadcast %16 : vector<1x32xf32> to vector<16x32xf32>
    %21 = arith.mulf %20, %19 : vector<16x32xf32>
    %22 = vector.broadcast %17 : vector<1x32xf32> to vector<16x32xf32>
    %23 = arith.addf %21, %22 : vector<16x32xf32>
    %c0_10 = arith.constant 0 : index
    %c0_11 = arith.constant 0 : index
    %24 = vector.load %arg3[%c0_10, %c0_11] : memref<16x32xf32, #tpu.memory_space<vmem>>, vector<16x32xf32>
    tpu.vector_store %arg3[%c0_10, %c0_11], %23 {strides = array<i32>} : memref<16x32xf32, #tpu.memory_space<vmem>>, vector<16x32xf32>,
    return
  }
  func.func @transform_0(%arg0: i32) -> (i32, i32) {
    %c0_i32 = arith.constant 0 : i32
    %c0_i32_0 = arith.constant 0 : i32
    return %arg0, %c0_i32 : i32, i32
  }
  func.func @transform_1(%arg0: i32) -> (i32, i32) {
    %c0_i32 = arith.constant 0 : i32
    %c0_i32_0 = arith.constant 0 : i32
    %c0_i32_1 = arith.constant 0 : i32
    return %c0_i32, %c0_i32_0 : i32, i32
  }
  func.func @transform_2(%arg0: i32) -> (i32, i32) {
    %c0_i32 = arith.constant 0 : i32
    %c0_i32_0 = arith.constant 0 : i32
    return %arg0, %c0_i32 : i32, i32
  }
}

</mosaic_0001>

<llo_original>
// kernel: tpu_custom_call.1
$region0: #{tpu_custom_call.1}
  #allocation0 [shape = 'u32[]', space=smem, size = 0x4, offset = 0x4, fixed_abs, tag = 'smem constant byte address 0x4 - core index']
  #allocation1 [shape = 'u32[144,128]{1,0:T(1,128)}', space=vmem, size = 0x12000, scoped, tag = 'internal scratch']
  %s0 = inlined_call_operand.hbm [shape: f32[16,32], index: 0, kind: input, shape index: {}]
  %s1 = inlined_call_operand.hbm [shape: f32[2,32], index: 1, kind: input, shape index: {}]
  %s2 = inlined_call_operand.hbm [shape: f32[16,32], index: 2, kind: output, shape index: {}]
  %s3 = sld [smem:[#allocation0]]
  $region26: #{tpu_custom_call.1} parent=0
    _
  %s5 = ssub.s32 1, %s3
  %s6 = scalar_select 0, %s5, %s3
  $region1: #{tpu_custom_call.1} parent=0
    #allocation2 [shape = 'u8[8192]{0}', space=vmem, size = 0x2000, scoped, tag = 'input window, operand 0, single buffered']
    #allocation3 [shape = 's32[1]{0}', space=sflag, size = 0x4, scoped, tag = 'scoped memory for tpu_custom_call.1']
    #allocation4 [shape = 's32[1]{0}', space=sflag, size = 0x4, scoped, tag = 'scoped memory for tpu_custom_call.1']
    #allocation5 [shape = 'u8[1024]{0}', space=vmem, size = 0x400, scoped, tag = 'input window, operand 1, single buffered']
    #allocation6 [shape = 's32[1]{0}', space=sflag, size = 0x4, scoped, tag = 'scoped memory for tpu_custom_call.1']
    #allocation7 [shape = 'u8[8192]{0}', space=vmem, size = 0x2000, scoped, tag = 'output window, operand 0, single buffered']
    %7 = vsyncpa [#allocation3], 0
    %8 = vsyncpa [#allocation6], 0
    %9 = vsyncpa [#allocation4], 0
    // Predicated region
    $region2: #{tpu_custom_call.1} parent=1 // pred_check
      _
    $region3: #{tpu_custom_call.1} parent=1 // pred_check_branch
      %11 = sbr.rel (0) target = $region5
    $region4: #{tpu_custom_call.1} parent=1 // pred_region
      %s13 = ssub.s32 256, 256
      %14 = vsyncadd [#allocation3], %s13
      %s15 = sshll.u32 [#allocation2], 4
      %s16 = int_to_ptr.vmem [resolvable:$true] %s15
      %21 = dma.hbm_to_vmem [thread:$0]  %s0, 256, %s16, [#allocation3], 128, 128, 8
    $region5: #{tpu_custom_call.1} parent=1 // pred_fallthru
      _
    // Predicated region
    $region6: #{tpu_custom_call.1} parent=1 // pred_check
      _
    $region7: #{tpu_custom_call.1} parent=1 // pred_check_branch
      %23 = sbr.rel (0) target = $region9
    $region8: #{tpu_custom_call.1} parent=1 // pred_region
      %s25 = ssub.s32 32, 32
      %26 = vsyncadd [#allocation6], %s25
      %s28 = sshll.u32 [#allocation5], 4
      %s29 = int_to_ptr.vmem [resolvable:$true] %s28
      %31 = dma.hbm_to_vmem [thread:$0]  %s1, 32, %s29, [#allocation6]
    $region9: #{tpu_custom_call.1} parent=1 // pred_fallthru
      _
    // Predicated region
    $region10: #{tpu_custom_call.1} parent=1 // pred_check
      _
    $region11: #{tpu_custom_call.1} parent=1 // pred_check_branch
      %33 = sbr.rel (0) target = $region13
    $region12: #{tpu_custom_call.1} parent=1 // pred_region
      %34 = dma.done [#allocation3], 256
    $region13: #{tpu_custom_call.1} parent=1 // pred_fallthru
      _
    // Predicated region
    $region14: #{tpu_custom_call.1} parent=1 // pred_check
      _
    $region15: #{tpu_custom_call.1} parent=1 // pred_check_branch
      %36 = sbr.rel (0) target = $region17
    $region16: #{tpu_custom_call.1} parent=1 // pred_region
      %37 = dma.done [#allocation6], 32
    $region17: #{tpu_custom_call.1} parent=1 // pred_fallthru
      _
    %v38 = vld [vmem:[#allocation2] sm:$0xff]
    %v39 = vld [vmem:[#allocation2 + $0x8] sm:$0xff]
    %vm40 = vcmask 261120
    %v41 = vsel %vm40, %v38, 0.0
    %42 = vadd.xlane.f32.xlu0 %v41
    %v43 = vpop.xlane.xlu0 %42
    %v44 = vsel %vm40, %v39, 0.0
    %45 = vadd.xlane.f32.xlu0 %v44
    %v46 = vpop.xlane.xlu0 %45
    %v47 = vrcp.pop 32.0
    %v48 = vmul.f32 %v43, %v47
    %v49 = vmul.f32 %v46, %v47
    %v50 = vsub.f32 %v38, %v48
    %v51 = vsub.f32 %v39, %v49
    %v52 = vmul.f32 %v50, %v50
    %v53 = vmul.f32 %v51, %v51
    %v54 = vsel %vm40, %v52, 0.0
    %55 = vadd.xlane.f32.xlu0 %v54
    %v56 = vpop.xlane.xlu0 %55
    %v57 = vsel %vm40, %v53, 0.0
    %58 = vadd.xlane.f32.xlu0 %v57
    %v59 = vpop.xlane.xlu0 %58
    %v60 = vmul.f32 %v56, %v47
    %v61 = vmul.f32 %v59, %v47
    %v62 = vadd.f32 %v60, 1e-12
    %v63 = vadd.f32 %v61, 1e-12
    %v64 = vrsqrt.pop %v62
    %v65 = vrsqrt.pop %v63
    %v66 = vld [vmem:[#allocation5] sm:$0x1]
    %v67 = vld [vmem:[#allocation5 + $0x1] sm:$0x1]
    %v68 = vmul.f32 %v50, %v64
    %v69 = vmul.f32 %v51, %v65
    %v70 = vlaneseq
    %v71 = vshrl.u32 %v70, 7
    %v72 = vsub.s32 0, %v71
    %v73 = vrot.slane %v66, %v72
    %v74 = vmul.f32 %v73, %v68
    %v75 = vmul.f32 %v73, %v69
    %v76 = vlaneseq
    %v77 = vshrl.u32 %v76, 7
    %v78 = vsub.s32 0, %v77
    %v79 = vrot.slane %v67, %v78
    %v80 = vadd.f32 %v74, %v79
    %v81 = vadd.f32 %v75, %v79
    %82 = vst.msk [vmem:[#allocation7] sm:$0xff] %vm40, %v80
    %83 = vst.msk [vmem:[#allocation7 + $0x8] sm:$0xff] %vm40, %v81
    // Predicated region
    $region18: #{tpu_custom_call.1} parent=1 // pred_check
      _
    $region19: #{tpu_custom_call.1} parent=1 // pred_check_branch
      %85 = sbr.rel (0) target = $region21
    $region20: #{tpu_custom_call.1} parent=1 // pred_region
      %s87 = ssub.s32 256, 256
      %88 = vsyncadd [#allocation4], %s87
      %s89 = sshll.u32 [#allocation7], 4
      %s90 = int_to_ptr.vmem [resolvable:$true] %s89
      %95 = dma.vmem_to_hbm [thread:$0]  %s90, 256, %s2, [#allocation4], 128, 128, 8
    $region21: #{tpu_custom_call.1} parent=1 // pred_fallthru
      _
    // Predicated region
    $region22: #{tpu_custom_call.1} parent=1 // pred_check
      _
    $region23: #{tpu_custom_call.1} parent=1 // pred_check_branch
      %97 = sbr.rel (0) target = $region25
    $region24: #{tpu_custom_call.1} parent=1 // pred_region
      %98 = dma.done [#allocation4], 256
    $region25: #{tpu_custom_call.1} parent=1 // pred_fallthru
      _
    %99 = vsyncpa [#allocation3], 1
    %100 = vsyncpa [#allocation6], 1
    %101 = vsyncpa [#allocation4], 1

</llo_original>
